<compile_context>
chip_gen: v6e
topology: v6e:2x2x1
jax: 0.10.0
libtpu: 0.0.40
codegen_flags: <defaults>
</compile_context>

<pallas_src>
import functools

import jax
import jax.numpy as jnp
from jax.experimental import pallas as pl
from jax.experimental.pallas import tpu as pltpu


def _rel_pos_kernel(emb_ref, out_ref, *, max_dist, tile_k):
    # emb_ref: (T, D) embedding table, resident in VMEM.
    # out_ref: (tile_k, Q, D) output block for keys
    #          [program_id(0)*tile_k, program_id(0)*tile_k + tile_k).
    T = emb_ref.shape[0]
    Q = out_ref.shape[1]
    k_base = pl.program_id(0) * tile_k

    emb = emb_ref[...]
    # bf16 one-hot x bf16 table is exact (one-hot selects a single row) and uses
    # the MXU's native bf16 path; otherwise compute in f32 (no redundant cast).
    compute_dtype = emb.dtype if emb.dtype in (jnp.bfloat16, jnp.float32) else jnp.float32
    emb = emb.astype(compute_dtype)

    # Loop-invariant iotas, hoisted out of the key loop.
    q_idx = jax.lax.broadcasted_iota(jnp.int32, (Q, 1), 0)   # (Q, 1)
    t_idx = jax.lax.broadcasted_iota(jnp.int32, (Q, T), 1)   # (Q, T)

    def body(k_local, carry):
        k = k_base + k_local
        rel = jnp.clip(q_idx - k, -max_dist, max_dist) + max_dist            # (Q, 1)
        onehot = (t_idx == rel).astype(compute_dtype)                        # (Q, T)
        gathered = jnp.dot(onehot, emb, preferred_element_type=jnp.float32)  # (Q, D)
        out_ref[k_local] = gathered.astype(out_ref.dtype)
        return carry

    jax.lax.fori_loop(0, tile_k, body, 0, unroll=min(8, tile_k))


def _pick_tile_k(key_length, query_length, d, itemsize,
                 vmem_budget_bytes=16 * 1024 * 1024, max_tile=128):
    """Largest key tile whose double-buffered output block fits a VMEM budget
    that is safe on v5e/v6e/v7x, keeping >= 2 grid steps when possible."""
    per_key = max(1, query_length * d * itemsize)
    t = max(1, vmem_budget_bytes // (2 * per_key))   # output block is double-buffered
    t = min(t, max_tile, key_length)
    if key_length > 1:
        t = min(t, -(-key_length // 2))              # grid >= 2 (v7x megacore)
    return int(max(1, t))


def relative_positional_encoding(position_embeddings, query_length, key_length,
                                 max_relative_distance, tile_k=None):
    """Returns (key_length, query_length, D) relative position embeddings."""
    T, D = position_embeddings.shape
    assert T == 2 * max_relative_distance + 1
    itemsize = jnp.dtype(position_embeddings.dtype).itemsize
    if tile_k is None:
        tile_k = _pick_tile_k(key_length, query_length, D, itemsize)

    kernel = functools.partial(_rel_pos_kernel,
                               max_dist=max_relative_distance, tile_k=tile_k)

    # Store-bound: output bytes dominate; give XLA a hint for scheduling.
    flops = 2 * key_length * query_length * T * D
    bytes_accessed = key_length * query_length * D * itemsize + T * D * itemsize

    out = pl.pallas_call(
        kernel,
        out_shape=jax.ShapeDtypeStruct((key_length, query_length, D),
                                       position_embeddings.dtype),
        grid=(pl.cdiv(key_length, tile_k),),
        in_specs=[pl.BlockSpec((T, D), lambda i: (0, 0))],   # table stays resident
        out_specs=pl.BlockSpec((tile_k, query_length, D), lambda i: (i, 0, 0)),
        compiler_params=pltpu.CompilerParams(
            dimension_semantics=("parallel",),
            vmem_limit_bytes=48 * 1024 * 1024),
        cost_estimate=pl.CostEstimate(flops=flops, transcendentals=0,
                                      bytes_accessed=bytes_accessed),
    )(position_embeddings)
    return out


def _reference(position_embeddings, query_length, key_length, max_relative_distance):
    q = jnp.arange(query_length)
    k = jnp.arange(key_length)
    rel = q[None, :] - k[:, None]                      # (K, Q)
    idx = jnp.clip(rel, -max_relative_distance, max_relative_distance) + max_relative_distance
    return position_embeddings[idx]                    # (K, Q, D)


def _xavier_uniform(key, t, d):
    bound = (6.0 / (t + d)) ** 0.5
    return jax.random.uniform(key, (t, d), dtype=jnp.float32,
                              minval=-bound, maxval=bound)


if __name__ == "__main__":
    # TODO(synk): the module's Python-side result cache (self._cache) is host
    # memoization, not a kernel concern; it is intentionally not reproduced here.
    root = jax.random.PRNGKey(0)
    key1, key2 = jax.random.split(root)

    # Small config consistent with the module __init__.
    D, max_dist, Q, K = 32, 4, 8, 8
    T = 2 * max_dist + 1
    emb = _xavier_uniform(key1, T, D)

    out = jax.block_until_ready(relative_positional_encoding(emb, Q, K, max_dist))
    ref = _reference(emb, Q, K, max_dist)
    assert out.shape == (K, Q, D)
    assert jnp.allclose(out, ref, atol=1e-6), "mismatch vs reference (config 1)"

    # Second config exercising key-blocking with a partial last tile.
    D2, max_dist2, Q2, K2 = 64, 5, 16, 37
    T2 = 2 * max_dist2 + 1
    emb2 = _xavier_uniform(key2, T2, D2)
    out2 = jax.block_until_ready(relative_positional_encoding(emb2, Q2, K2, max_dist2))
    ref2 = _reference(emb2, Q2, K2, max_dist2)
    assert out2.shape == (K2, Q2, D2)
    assert jnp.allclose(out2, ref2, atol=1e-6), "mismatch vs reference (config 2)"

    print("KERNEL_OK")
</pallas_src>

<mosaic_0001>
module attributes {stable_mosaic.version = 11 : i64} {
  func.func @_rel_pos_kernel(%arg0: i32, %arg1: memref<9x32xf32, #tpu.memory_space<vmem>>, %arg2: memref<4x8x32xf32, #tpu.memory_space<vmem>>) attributes {dimension_semantics = [#tpu.dimension_semantics<parallel>], iteration_bounds = array<i64: 2>, scalar_prefetch = 0 : i64, scratch_operands = 0 : i64, tpu.core_type = #tpu.core_type<tc>, window_params = [{pipeline_mode = #tpu.pipeline_mode<synchronous>, transform_indices = @transform_0, window_bounds = array<i64: 9, 32>}, {transform_indices = @transform_1, window_bounds = array<i64: 4, 8, 32>}]} {
    %c4_i32 = arith.constant 4 : i32
    %0 = arith.muli %arg0, %c4_i32 : i32
    %c0 = arith.constant 0 : index
    %c0_0 = arith.constant 0 : index
    %1 = vector.load %arg1[%c0, %c0_0] : memref<9x32xf32, #tpu.memory_space<vmem>>, vector<9x32xf32>
    %2 = tpu.iota {dimensions = array<i32: 0>} : vector<8x1xi32>
    %3 = tpu.iota {dimensions = array<i32: 1>} : vector<8x9xi32>
    %c0_i32 = arith.constant 0 : i32
    %4 = arith.addi %0, %c0_i32 : i32
    %5 = vector.broadcast %4 : i32 to vector<8x1xi32>
    %6 = arith.subi %2, %5 : vector<8x1xi32>
    %c-4_i32 = arith.constant -4 : i32
    %c4_i32_1 = arith.constant 4 : i32
    %7 = vector.broadcast %c-4_i32 : i32 to vector<8x1xi32>
    %8 = arith.maxsi %7, %6 : vector<8x1xi32>
    %9 = vector.broadcast %c4_i32_1 : i32 to vector<8x1xi32>
    %10 = arith.minsi %9, %8 : vector<8x1xi32>
    %c4_i32_2 = arith.constant 4 : i32
    %11 = vector.broadcast %c4_i32_2 : i32 to vector<8x1xi32>
    %12 = arith.addi %10, %11 : vector<8x1xi32>
    %13 = vector.broadcast %12 : vector<8x1xi32> to vector<8x9xi32>
    %14 = arith.cmpi eq, %3, %13 : vector<8x9xi32>
    %15 = arith.extui %14 : vector<8x9xi1> to vector<8x9xi32>
    %16 = arith.sitofp %15 : vector<8x9xi32> to vector<8x9xf32>
    %cst = arith.constant dense<0.000000e+00> : vector<8x32xf32>
    %17 = tpu.matmul %16, %1, %cst {dimension_numbers = #tpu.dot_dimension_numbers<[1], [0], [0], [1], [0, 0, 1, 1], [], []>} : vector<8x9xf32>, vector<9x32xf32>, vector<8x32xf32> -> vector<8x32xf32>
    %18 = arith.index_cast %c0_i32 : i32 to index
    %c0_3 = arith.constant 0 : index
    %c0_4 = arith.constant 0 : index
    %19 = vector.load %arg2[%18, %c0_3, %c0_4] : memref<4x8x32xf32, #tpu.memory_space<vmem>>, vector<1x8x32xf32>
    %20 = vector.shape_cast %19 : vector<1x8x32xf32> to vector<8x32xf32>
    %21 = vector.shape_cast %17 : vector<8x32xf32> to vector<1x8x32xf32>
    tpu.vector_store %arg2[%18, %c0_3, %c0_4], %21 {strides = array<i32>} : memref<4x8x32xf32, #tpu.memory_space<vmem>>, vector<1x8x32xf32>,
    %c1_i32 = arith.constant 1 : i32
    %22 = arith.addi %0, %c1_i32 : i32
    %23 = vector.broadcast %22 : i32 to vector<8x1xi32>
    %24 = arith.subi %2, %23 : vector<8x1xi32>
    %c-4_i32_5 = arith.constant -4 : i32
    %c4_i32_6 = arith.constant 4 : i32
    %25 = vector.broadcast %c-4_i32_5 : i32 to vector<8x1xi32>
    %26 = arith.maxsi %25, %24 : vector<8x1xi32>
    %27 = vector.broadcast %c4_i32_6 : i32 to vector<8x1xi32>
    %28 = arith.minsi %27, %26 : vector<8x1xi32>
    %c4_i32_7 = arith.constant 4 : i32
    %29 = vector.broadcast %c4_i32_7 : i32 to vector<8x1xi32>
    %30 = arith.addi %28, %29 : vector<8x1xi32>
    %31 = vector.broadcast %30 : vector<8x1xi32> to vector<8x9xi32>
    %32 = arith.cmpi eq, %3, %31 : vector<8x9xi32>
    %33 = arith.extui %32 : vector<8x9xi1> to vector<8x9xi32>
    %34 = arith.sitofp %33 : vector<8x9xi32> to vector<8x9xf32>
    %cst_8 = arith.constant dense<0.000000e+00> : vector<8x32xf32>
    %35 = tpu.matmul %34, %1, %cst_8 {dimension_numbers = #tpu.dot_dimension_numbers<[1], [0], [0], [1], [0, 0, 1, 1], [], []>} : vector<8x9xf32>, vector<9x32xf32>, vector<8x32xf32> -> vector<8x32xf32>
    %36 = arith.index_cast %c1_i32 : i32 to index
    %c0_9 = arith.constant 0 : index
    %c0_10 = arith.constant 0 : index
    %37 = vector.load %arg2[%36, %c0_9, %c0_10] : memref<4x8x32xf32, #tpu.memory_space<vmem>>, vector<1x8x32xf32>
    %38 = vector.shape_cast %37 : vector<1x8x32xf32> to vector<8x32xf32>
    %39 = vector.shape_cast %35 : vector<8x32xf32> to vector<1x8x32xf32>
    tpu.vector_store %arg2[%36, %c0_9, %c0_10], %39 {strides = array<i32>} : memref<4x8x32xf32, #tpu.memory_space<vmem>>, vector<1x8x32xf32>,
    %c2_i32 = arith.constant 2 : i32
    %40 = arith.addi %0, %c2_i32 : i32
    %41 = vector.broadcast %40 : i32 to vector<8x1xi32>
    %42 = arith.subi %2, %41 : vector<8x1xi32>
    %c-4_i32_11 = arith.constant -4 : i32
    %c4_i32_12 = arith.constant 4 : i32
    %43 = vector.broadcast %c-4_i32_11 : i32 to vector<8x1xi32>
    %44 = arith.maxsi %43, %42 : vector<8x1xi32>
    %45 = vector.broadcast %c4_i32_12 : i32 to vector<8x1xi32>
    %46 = arith.minsi %45, %44 : vector<8x1xi32>
    %c4_i32_13 = arith.constant 4 : i32
    %47 = vector.broadcast %c4_i32_13 : i32 to vector<8x1xi32>
    %48 = arith.addi %46, %47 : vector<8x1xi32>
    %49 = vector.broadcast %48 : vector<8x1xi32> to vector<8x9xi32>
    %50 = arith.cmpi eq, %3, %49 : vector<8x9xi32>
    %51 = arith.extui %50 : vector<8x9xi1> to vector<8x9xi32>
    %52 = arith.sitofp %51 : vector<8x9xi32> to vector<8x9xf32>
    %cst_14 = arith.constant dense<0.000000e+00> : vector<8x32xf32>
    %53 = tpu.matmul %52, %1, %cst_14 {dimension_numbers = #tpu.dot_dimension_numbers<[1], [0], [0], [1], [0, 0, 1, 1], [], []>} : vector<8x9xf32>, vector<9x32xf32>, vector<8x32xf32> -> vector<8x32xf32>
    %54 = arith.index_cast %c2_i32 : i32 to index
    %c0_15 = arith.constant 0 : index
    %c0_16 = arith.constant 0 : index
    %55 = vector.load %arg2[%54, %c0_15, %c0_16] : memref<4x8x32xf32, #tpu.memory_space<vmem>>, vector<1x8x32xf32>
    %56 = vector.shape_cast %55 : vector<1x8x32xf32> to vector<8x32xf32>
    %57 = vector.shape_cast %53 : vector<8x32xf32> to vector<1x8x32xf32>
    tpu.vector_store %arg2[%54, %c0_15, %c0_16], %57 {strides = array<i32>} : memref<4x8x32xf32, #tpu.memory_space<vmem>>, vector<1x8x32xf32>,
    %c3_i32 = arith.constant 3 : i32
    %58 = arith.addi %0, %c3_i32 : i32
    %59 = vector.broadcast %58 : i32 to vector<8x1xi32>
    %60 = arith.subi %2, %59 : vector<8x1xi32>
    %c-4_i32_17 = arith.constant -4 : i32
    %c4_i32_18 = arith.constant 4 : i32
    %61 = vector.broadcast %c-4_i32_17 : i32 to vector<8x1xi32>
    %62 = arith.maxsi %61, %60 : vector<8x1xi32>
    %63 = vector.broadcast %c4_i32_18 : i32 to vector<8x1xi32>
    %64 = arith.minsi %63, %62 : vector<8x1xi32>
    %c4_i32_19 = arith.constant 4 : i32
    %65 = vector.broadcast %c4_i32_19 : i32 to vector<8x1xi32>
    %66 = arith.addi %64, %65 : vector<8x1xi32>
    %67 = vector.broadcast %66 : vector<8x1xi32> to vector<8x9xi32>
    %68 = arith.cmpi eq, %3, %67 : vector<8x9xi32>
    %69 = arith.extui %68 : vector<8x9xi1> to vector<8x9xi32>
    %70 = arith.sitofp %69 : vector<8x9xi32> to vector<8x9xf32>
    %cst_20 = arith.constant dense<0.000000e+00> : vector<8x32xf32>
    %71 = tpu.matmul %70, %1, %cst_20 {dimension_numbers = #tpu.dot_dimension_numbers<[1], [0], [0], [1], [0, 0, 1, 1], [], []>} : vector<8x9xf32>, vector<9x32xf32>, vector<8x32xf32> -> vector<8x32xf32>
    %72 = arith.index_cast %c3_i32 : i32 to index
    %c0_21 = arith.constant 0 : index
    %c0_22 = arith.constant 0 : index
    %73 = vector.load %arg2[%72, %c0_21, %c0_22] : memref<4x8x32xf32, #tpu.memory_space<vmem>>, vector<1x8x32xf32>
    %74 = vector.shape_cast %73 : vector<1x8x32xf32> to vector<8x32xf32>
    %75 = vector.shape_cast %71 : vector<8x32xf32> to vector<1x8x32xf32>
    tpu.vector_store %arg2[%72, %c0_21, %c0_22], %75 {strides = array<i32>} : memref<4x8x32xf32, #tpu.memory_space<vmem>>, vector<1x8x32xf32>,
    %c4_i32_23 = arith.constant 4 : i32
    return
  }
  func.func @transform_0(%arg0: i32) -> (i32, i32) {
    %c0_i32 = arith.constant 0 : i32
    %c0_i32_0 = arith.constant 0 : i32
    %c0_i32_1 = arith.constant 0 : i32
    return %c0_i32, %c0_i32_0 : i32, i32
  }
  func.func @transform_1(%arg0: i32) -> (i32, i32, i32) {
    %c0_i32 = arith.constant 0 : i32
    %c0_i32_0 = arith.constant 0 : i32
    %c0_i32_1 = arith.constant 0 : i32
    return %arg0, %c0_i32, %c0_i32_0 : i32, i32, i32
  }
}

</mosaic_0001>

<llo_original>
// kernel: tpu_custom_call.1
$region0: #{tpu_custom_call.1}
  #allocation0 [shape = 'u32[]', space=smem, size = 0x4, offset = 0x4, fixed_abs, tag = 'smem constant byte address 0x4 - core index']
  #allocation1 [shape = 'u32[144,128]{1,0:T(1,128)}', space=vmem, size = 0x12000, scoped, tag = 'internal scratch']
  %s0 = inlined_call_operand.hbm [shape: f32[9,32], index: 0, kind: input, shape index: {}]
  %s1 = inlined_call_operand.hbm [shape: f32[8,8,32], index: 1, kind: output, shape index: {}]
  %s2 = sld [smem:[#allocation0]]
  $region41: #{tpu_custom_call.1} parent=0
    _
  %s4 = ssub.s32 1, %s2
  %s5 = scalar_select 0, %s4, %s2
  $region1: #{tpu_custom_call.1} parent=0
    #allocation2 [shape = 'u8[8192]{0}', space=vmem, size = 0x2000, scoped, tag = 'input window, operand 0, single buffered']
    #allocation3 [shape = 's32[2]{0}', space=sflag, size = 0x8, scoped, tag = 'scoped memory for tpu_custom_call.1']
    #allocation4 [shape = 's32[2]{0}', space=sflag, size = 0x8, scoped, tag = 'scoped memory for tpu_custom_call.1']
    #allocation5 [shape = 'u8[32768]{0}', space=vmem, size = 0x8000, scoped, tag = 'output window, operand 0']
    %6 = vsyncpa [#allocation3], 0
    %7 = vsyncpa [#allocation4], 0
    %s8 = scalar_lea.sflag [#allocation4], 1
    %9 = vsyncpa %s8, 0
    loop: start=0, step=1, limit=4
    $region2: #{tpu_custom_call.1} parent=1 // loop_pre_header
      _
    $region3: #{tpu_custom_call.1} parent=1 // loop_header
      %s11 = sphi 0, %s15
      %p12 = scmp.ge.s32.totalorder %s11, 4
      %s19 = sphi 0, %s19
      %s21 = sphi 0, %s19
      %s22 = sphi 0, %s21
      %s36 = sphi 0, %s22
      %s42 = sphi 0, %s44
      %s45 = sphi 0, %s42
      %s46 = sphi 0, %s45
      %s62 = sphi 0, %s46
    $region4: #{tpu_custom_call.1} parent=1 // loop_header_branch
      %14 = sbr.rel (%p12) target = $region8
    $region5: #{tpu_custom_call.1} parent=1 // loop_body
      %s16 = ssub.s32 %s11, 1
      %s17 = ssub.s32 %s11, 2
      %s18 = sadd.s32 %s11, 1
      %s20 = sadd.s32 %s19, 1
      %p23 = scmp.eq.s32.totalorder %s11, 1
      %p24 = scmp.ne.s32.totalorder %s19, %s21
      %p25 = scmp.eq.s32.totalorder %s11, 0
      %p26 = por %p24, %p25
      %p27 = scmp.ne.s32.totalorder %s19, %s21
      %p28 = scmp.eq.s32.totalorder %s16, 1
      %p29 = por %p27, %p28
      %p30 = scmp.ne.s32.totalorder %s21, %s22
      %p31 = scmp.eq.s32.totalorder %s16, 0
      %p32 = por %p30, %p31
      %p33 = scmp.ne.s32.totalorder %s21, %s22
      %p34 = scmp.eq.s32.totalorder %s17, 1
      %p35 = por %p33, %p34
      %p37 = scmp.ne.s32.totalorder %s22, %s36
      %p38 = scmp.eq.s32.totalorder %s17, 0
      %p39 = por %p37, %p38
      %s40 = ssub.s32 %s11, %s18
      %p41 = scmp.eq.s32.totalorder %s40, 0
      %s43 = sadd.s32 %s42, 1
      %s44 = scalar_select %p41, %s42, %s43
      %p47 = pneg %p41
      %p48 = scmp.eq.s32.totalorder %s11, 1
      %p49 = por %p47, %p48
      %p50 = scmp.ne.s32.totalorder %s42, %s45
      %p51 = scmp.eq.s32.totalorder %s11, 0
      %p52 = por %p50, %p51
      %p53 = scmp.ne.s32.totalorder %s42, %s45
      %p54 = scmp.eq.s32.totalorder %s16, 1
      %p55 = por %p53, %p54
      %p56 = scmp.ne.s32.totalorder %s45, %s46
      %p57 = scmp.eq.s32.totalorder %s16, 0
      %p58 = por %p56, %p57
      %p59 = scmp.ne.s32.totalorder %s45, %s46
      %p60 = scmp.eq.s32.totalorder %s17, 1
      %p61 = por %p59, %p60
      %p63 = scmp.ne.s32.totalorder %s46, %s62
      %p64 = scmp.eq.s32.totalorder %s17, 0
      %p65 = por %p63, %p64
      %p66 = scmp.le.s32.totalorder 1, %s11
      %p67 = scmp.lt.s32.totalorder %s11, 3
      %p68 = pnand %p66, %p67
      %p69 = pneg %p68
      // Predicated region
      $region9: #{tpu_custom_call.1} parent=5 // pred_check
        _
      $region10: #{tpu_custom_call.1} parent=5 // pred_check_branch
        %71 = sbr.rel (%p68) target = $region12
      $region11: #{tpu_custom_call.1} parent=5 // pred_region
        %s72 = ssub.s32 %s11, 1
        // Predicated region
        $region13: #{tpu_custom_call.1} parent=11 // pred_check
          %p73 = pneg %p32
        $region14: #{tpu_custom_call.1} parent=11 // pred_check_branch
          %75 = sbr.rel (%p73) target = $region16
        $region15: #{tpu_custom_call.1} parent=11 // pred_region
          %s77 = ssub.s32 256, 256
          %78 = vsyncadd [#allocation3], %s77
          %s79 = sshll.u32 [#allocation2], 4
          %s80 = int_to_ptr.vmem [resolvable:$true] %s79
          %85 = dma.hbm_to_vmem [thread:$0]  %s0, 256, %s80, [#allocation3], 128, 128, 8
        $region16: #{tpu_custom_call.1} parent=11 // pred_fallthru
          _
      $region12: #{tpu_custom_call.1} parent=5 // pred_fallthru
        _
      %p86 = scmp.lt.s32.totalorder %s11, 2
      // Predicated region
      $region17: #{tpu_custom_call.1} parent=5 // pred_check
        %p87 = pneg %p86
      $region18: #{tpu_custom_call.1} parent=5 // pred_check_branch
        %89 = sbr.rel (%p87) target = $region20
      $region19: #{tpu_custom_call.1} parent=5 // pred_region
        _
      $region20: #{tpu_custom_call.1} parent=5 // pred_fallthru
        _
      %p90 = scmp.le.s32.totalorder 1, %s11
      %p91 = scmp.lt.s32.totalorder %s11, 3
      %p92 = pnand %p90, %p91
      %p93 = pneg %p92
      // Predicated region
      $region21: #{tpu_custom_call.1} parent=5 // pred_check
        _
      $region22: #{tpu_custom_call.1} parent=5 // pred_check_branch
        %95 = sbr.rel (%p92) target = $region24
      $region23: #{tpu_custom_call.1} parent=5 // pred_region
        %s96 = ssub.s32 %s11, 1
        // Predicated region
        $region25: #{tpu_custom_call.1} parent=23 // pred_check
          %p97 = pneg %p32
        $region26: #{tpu_custom_call.1} parent=23 // pred_check_branch
          %99 = sbr.rel (%p97) target = $region28
        $region27: #{tpu_custom_call.1} parent=23 // pred_region
          %100 = dma.done [#allocation3], 256
        $region28: #{tpu_custom_call.1} parent=23 // pred_fallthru
          _
        %p101 = pneg %p32
        %p102 = pneg %p29
        %p103 = pneg %p58
        %p104 = pneg %p55
        %s105 = sand.u32 %s45, 1
        %s106 = scalar_lea.sflag [#allocation4], %s105
        %s107 = sand.u32 %s45, 1
        %s108 = smul.addr %s107, 32
        %s109 = scalar_lea.vmem [#allocation5], %s108
        %s110 = smul.u32 4, %s16
        %s111 = smul.u32 %s16, 4
        %v112 = vld [vmem:[#allocation2] sm:$0xff]
        %v113 = vld [vmem:[#allocation2 + $0x8] sm:$0x1]
        %v114 = vlaneseq
        %v115 = vshrl.u32 %v114, 7
        %v116 = vlaneseq
        %v117 = vand.u32 %v116, 127
        %v118 = vstv %s111
        %v119 = vsub.s32 %v115, %v118
        %vm120 = vcmp.gt.s32.totalorder %v119, 4294967292
        %v121 = vsel %vm120, %v119, 4294967292
        %vm122 = vcmp.lt.s32.totalorder %v121, 4
        %v123 = vsel %vm122, %v121, 4
        %v124 = vadd.s32 %v123, 4
        %vm125 = vcmp.eq.s32.totalorder %v117, %v124
        %v126 = vsel %vm125, 1, 0
        %v127 = vcvt.s32.f32 %v126
        %vm128 = vcmask 72704
        %v130 = vsel %vm128, %v127, 0
        %vm132 = vcmask 1040384
        %v134 = vsel %vm132, %v113, 0
        %136 = vmatprep.subr.mxu0 0.0
        %137 = vmatpush1.msra.mxu0 0.0
        %138 = vmatprep.subr.mxu0 0.0
        %139 = vmatpush1.msra.mxu0 0.0
        %140 = vmatprep.subr.mxu0 0.0
        %141 = vmatpush1.msra.mxu0 0.0
        %142 = vmatprep.subr.mxu0 0.0
        %143 = vmatpush1.msra.mxu0 0.0
        %144 = vmatprep.subr.mxu0 0.0
        %145 = vmatpush1.msra.mxu0 0.0
        %146 = vmatprep.subr.mxu0 0.0
        %147 = vmatpush1.msra.mxu0 0.0
        %148 = vmatprep.subr.mxu0 0.0
        %149 = vmatpush1.msra.mxu0 0.0
        %150 = vmatprep.subr.mxu0 0.0
        %151 = vmatpush1.msra.mxu0 0.0
        %152 = vmatprep.subr.mxu0 0.0
        %153 = vmatpush1.msra.mxu0 0.0
        %154 = vmatprep.subr.mxu0 0.0
        %155 = vmatpush1.msra.mxu0 0.0
        %156 = vmatprep.subr.mxu0 0.0
        %157 = vmatpush1.msra.mxu0 0.0
        %158 = vmatprep.subr.mxu0 0.0
        %159 = vmatpush1.msra.mxu0 0.0
        %160 = vmatprep.subr.mxu0 0.0
        %161 = vmatpush1.msra.mxu0 0.0
        %162 = vmatprep.subr.mxu0 0.0
        %163 = vmatpush1.msra.mxu0 0.0
        %164 = vmatprep.subr.mxu0 0.0
        %165 = vmatpush1.msra.mxu0 %v134
        %166 = vmatprep.subr.mxu0 0.0
        %167 = vmatpush1.msra.mxu0 %v112
        %168 = vmatprep.subr.mxu0 0.0
        %169 = vmatpush2.msra.mxu0 0.0
        %170 = vmatprep.subr.mxu0 0.0
        %171 = vmatpush2.msra.mxu0 0.0
        %172 = vmatprep.subr.mxu0 0.0
        %173 = vmatpush2.msra.mxu0 0.0
        %174 = vmatprep.subr.mxu0 0.0
        %175 = vmatpush2.msra.mxu0 0.0
        %176 = vmatprep.subr.mxu0 0.0
        %177 = vmatpush2.msra.mxu0 0.0
        %178 = vmatprep.subr.mxu0 0.0
        %179 = vmatpush2.msra.mxu0 0.0
        %180 = vmatprep.subr.mxu0 0.0
        %181 = vmatpush2.msra.mxu0 0.0
        %182 = vmatprep.subr.mxu0 0.0
        %183 = vmatpush2.msra.mxu0 0.0
        %184 = vmatprep.subr.mxu0 0.0
        %185 = vmatpush2.msra.mxu0 0.0
        %186 = vmatprep.subr.mxu0 0.0
        %187 = vmatpush2.msra.mxu0 0.0
        %188 = vmatprep.subr.mxu0 0.0
        %189 = vmatpush2.msra.mxu0 0.0
        %190 = vmatprep.subr.mxu0 0.0
        %191 = vmatpush2.msra.mxu0 0.0
        %192 = vmatprep.subr.mxu0 0.0
        %193 = vmatpush2.msra.mxu0 0.0
        %194 = vmatprep.subr.mxu0 0.0
        %195 = vmatpush2.msra.mxu0 0.0
        %196 = vmatprep.subr.mxu0 0.0
        %197 = vmatpush2.msra.mxu0 0.0
        %198 = vmatprep.subr.mxu0 0.0
        %199 = vmatpush2.msra.mxu0 0.0
        %200 = vmatprep.mubr.f32.mxu0 0.0
        %201 = vmatmul.mubr.f32.gmra.mxu0 %v130
        %v202 = vpop.f32.mrf.mxu0
        %v203 = vadd.f32 0.0, %v202
        %v204 = vpop.f32.mrf.mxu0
        %205 = vdwg.mxu0
        %vm206 = vcmask 261120
        %207 = vst.msk [vmem:[%s109] sm:$0xff] %vm206, %v203
        %s208 = sadd.s32 %s111, 1
        %v209 = vstv %s208
        %v210 = vsub.s32 %v115, %v209
        %vm211 = vcmp.gt.s32.totalorder %v210, 4294967292
        %v212 = vsel %vm211, %v210, 4294967292
        %vm213 = vcmp.lt.s32.totalorder %v212, 4
        %v214 = vsel %vm213, %v212, 4
        %v215 = vadd.s32 %v214, 4
        %vm216 = vcmp.eq.s32.totalorder %v117, %v215
        %v217 = vsel %vm216, 1, 0
        %v218 = vcvt.s32.f32 %v217
        %v220 = vsel %vm128, %v218, 0
        %222 = vmatprep.subr.mxu0 0.0
        %223 = vmatpush1.msra.mxu0 0.0
        %224 = vmatprep.subr.mxu0 0.0
        %225 = vmatpush1.msra.mxu0 0.0
        %226 = vmatprep.subr.mxu0 0.0
        %227 = vmatpush1.msra.mxu0 0.0
        %228 = vmatprep.subr.mxu0 0.0
        %229 = vmatpush1.msra.mxu0 0.0
        %230 = vmatprep.subr.mxu0 0.0
        %231 = vmatpush1.msra.mxu0 0.0
        %232 = vmatprep.subr.mxu0 0.0
        %233 = vmatpush1.msra.mxu0 0.0
        %234 = vmatprep.subr.mxu0 0.0
        %235 = vmatpush1.msra.mxu0 0.0
        %236 = vmatprep.subr.mxu0 0.0
        %237 = vmatpush1.msra.mxu0 0.0
        %238 = vmatprep.subr.mxu0 0.0
        %239 = vmatpush1.msra.mxu0 0.0
        %240 = vmatprep.subr.mxu0 0.0
        %241 = vmatpush1.msra.mxu0 0.0
        %242 = vmatprep.subr.mxu0 0.0
        %243 = vmatpush1.msra.mxu0 0.0
        %244 = vmatprep.subr.mxu0 0.0
        %245 = vmatpush1.msra.mxu0 0.0
        %246 = vmatprep.subr.mxu0 0.0
        %247 = vmatpush1.msra.mxu0 0.0
        %248 = vmatprep.subr.mxu0 0.0
        %249 = vmatpush1.msra.mxu0 0.0
        %250 = vmatprep.subr.mxu0 0.0
        %251 = vmatpush1.msra.mxu0 %v134
        %252 = vmatprep.subr.mxu0 0.0
        %253 = vmatpush1.msra.mxu0 %v112
        %254 = vmatprep.subr.mxu0 0.0
        %255 = vmatpush2.msra.mxu0 0.0
        %256 = vmatprep.subr.mxu0 0.0
        %257 = vmatpush2.msra.mxu0 0.0
        %258 = vmatprep.subr.mxu0 0.0
        %259 = vmatpush2.msra.mxu0 0.0
        %260 = vmatprep.subr.mxu0 0.0
        %261 = vmatpush2.msra.mxu0 0.0
        %262 = vmatprep.subr.mxu0 0.0
        %263 = vmatpush2.msra.mxu0 0.0
        %264 = vmatprep.subr.mxu0 0.0
        %265 = vmatpush2.msra.mxu0 0.0
        %266 = vmatprep.subr.mxu0 0.0
        %267 = vmatpush2.msra.mxu0 0.0
        %268 = vmatprep.subr.mxu0 0.0
        %269 = vmatpush2.msra.mxu0 0.0
        %270 = vmatprep.subr.mxu0 0.0
        %271 = vmatpush2.msra.mxu0 0.0
        %272 = vmatprep.subr.mxu0 0.0
        %273 = vmatpush2.msra.mxu0 0.0
        %274 = vmatprep.subr.mxu0 0.0
        %275 = vmatpush2.msra.mxu0 0.0
        %276 = vmatprep.subr.mxu0 0.0
        %277 = vmatpush2.msra.mxu0 0.0
        %278 = vmatprep.subr.mxu0 0.0
        %279 = vmatpush2.msra.mxu0 0.0
        %280 = vmatprep.subr.mxu0 0.0
        %281 = vmatpush2.msra.mxu0 0.0
        %282 = vmatprep.subr.mxu0 0.0
        %283 = vmatpush2.msra.mxu0 0.0
        %284 = vmatprep.subr.mxu0 0.0
        %285 = vmatpush2.msra.mxu0 0.0
        %286 = vmatprep.mubr.f32.mxu0 0.0
        %287 = vmatmul.mubr.f32.gmra.mxu0 %v220
        %v288 = vpop.f32.mrf.mxu0
        %v289 = vadd.f32 0.0, %v288
        %v290 = vpop.f32.mrf.mxu0
        %291 = vdwg.mxu0
        %s292 = scalar_lea.vmem %s109, 8 [#allocation5]
        %293 = vst.msk [vmem:[%s292] sm:$0xff] %vm206, %v289
        %s294 = sadd.s32 %s111, 2
        %v295 = vstv %s294
        %v296 = vsub.s32 %v115, %v295
        %vm297 = vcmp.gt.s32.totalorder %v296, 4294967292
        %v298 = vsel %vm297, %v296, 4294967292
        %vm299 = vcmp.lt.s32.totalorder %v298, 4
        %v300 = vsel %vm299, %v298, 4
        %v301 = vadd.s32 %v300, 4
        %vm302 = vcmp.eq.s32.totalorder %v117, %v301
        %v303 = vsel %vm302, 1, 0
        %v304 = vcvt.s32.f32 %v303
        %v306 = vsel %vm128, %v304, 0
        %308 = vmatprep.subr.mxu0 0.0
        %309 = vmatpush1.msra.mxu0 0.0
        %310 = vmatprep.subr.mxu0 0.0
        %311 = vmatpush1.msra.mxu0 0.0
        %312 = vmatprep.subr.mxu0 0.0
        %313 = vmatpush1.msra.mxu0 0.0
        %314 = vmatprep.subr.mxu0 0.0
        %315 = vmatpush1.msra.mxu0 0.0
        %316 = vmatprep.subr.mxu0 0.0
        %317 = vmatpush1.msra.mxu0 0.0
        %318 = vmatprep.subr.mxu0 0.0
        %319 = vmatpush1.msra.mxu0 0.0
        %320 = vmatprep.subr.mxu0 0.0
        %321 = vmatpush1.msra.mxu0 0.0
        %322 = vmatprep.subr.mxu0 0.0
        %323 = vmatpush1.msra.mxu0 0.0
        %324 = vmatprep.subr.mxu0 0.0
        %325 = vmatpush1.msra.mxu0 0.0
        %326 = vmatprep.subr.mxu0 0.0
        %327 = vmatpush1.msra.mxu0 0.0
        %328 = vmatprep.subr.mxu0 0.0
        %329 = vmatpush1.msra.mxu0 0.0
        %330 = vmatprep.subr.mxu0 0.0
        %331 = vmatpush1.msra.mxu0 0.0
        %332 = vmatprep.subr.mxu0 0.0
        %333 = vmatpush1.msra.mxu0 0.0
        %334 = vmatprep.subr.mxu0 0.0
        %335 = vmatpush1.msra.mxu0 0.0
        %336 = vmatprep.subr.mxu0 0.0
        %337 = vmatpush1.msra.mxu0 %v134
        %338 = vmatprep.subr.mxu0 0.0
        %339 = vmatpush1.msra.mxu0 %v112
        %340 = vmatprep.subr.mxu0 0.0
        %341 = vmatpush2.msra.mxu0 0.0
        %342 = vmatprep.subr.mxu0 0.0
        %343 = vmatpush2.msra.mxu0 0.0
        %344 = vmatprep.subr.mxu0 0.0
        %345 = vmatpush2.msra.mxu0 0.0
        %346 = vmatprep.subr.mxu0 0.0
        %347 = vmatpush2.msra.mxu0 0.0
        %348 = vmatprep.subr.mxu0 0.0
        %349 = vmatpush2.msra.mxu0 0.0
        %350 = vmatprep.subr.mxu0 0.0
        %351 = vmatpush2.msra.mxu0 0.0
        %352 = vmatprep.subr.mxu0 0.0
        %353 = vmatpush2.msra.mxu0 0.0
        %354 = vmatprep.subr.mxu0 0.0
        %355 = vmatpush2.msra.mxu0 0.0
        %356 = vmatprep.subr.mxu0 0.0
        %357 = vmatpush2.msra.mxu0 0.0
        %358 = vmatprep.subr.mxu0 0.0
        %359 = vmatpush2.msra.mxu0 0.0
        %360 = vmatprep.subr.mxu0 0.0
        %361 = vmatpush2.msra.mxu0 0.0
        %362 = vmatprep.subr.mxu0 0.0
        %363 = vmatpush2.msra.mxu0 0.0
        %364 = vmatprep.subr.mxu0 0.0
        %365 = vmatpush2.msra.mxu0 0.0
        %366 = vmatprep.subr.mxu0 0.0
        %367 = vmatpush2.msra.mxu0 0.0
        %368 = vmatprep.subr.mxu0 0.0
        %369 = vmatpush2.msra.mxu0 0.0
        %370 = vmatprep.subr.mxu0 0.0
        %371 = vmatpush2.msra.mxu0 0.0
        %372 = vmatprep.mubr.f32.mxu0 0.0
        %373 = vmatmul.mubr.f32.gmra.mxu0 %v306
        %v374 = vpop.f32.mrf.mxu0
        %v375 = vadd.f32 0.0, %v374
        %v376 = vpop.f32.mrf.mxu0
        %377 = vdwg.mxu0
        %s378 = scalar_lea.vmem %s109, 16 [#allocation5]
        %379 = vst.msk [vmem:[%s378] sm:$0xff] %vm206, %v375
        %s380 = sadd.s32 %s111, 3
        %v381 = vstv %s380
        %v382 = vsub.s32 %v115, %v381
        %vm383 = vcmp.gt.s32.totalorder %v382, 4294967292
        %v384 = vsel %vm383, %v382, 4294967292
        %vm385 = vcmp.lt.s32.totalorder %v384, 4
        %v386 = vsel %vm385, %v384, 4
        %v387 = vadd.s32 %v386, 4
        %vm388 = vcmp.eq.s32.totalorder %v117, %v387
        %v389 = vsel %vm388, 1, 0
        %v390 = vcvt.s32.f32 %v389
        %v392 = vsel %vm128, %v390, 0
        %394 = vmatprep.subr.mxu0 0.0
        %395 = vmatpush1.msra.mxu0 0.0
        %396 = vmatprep.subr.mxu0 0.0
        %397 = vmatpush1.msra.mxu0 0.0
        %398 = vmatprep.subr.mxu0 0.0
        %399 = vmatpush1.msra.mxu0 0.0
        %400 = vmatprep.subr.mxu0 0.0
        %401 = vmatpush1.msra.mxu0 0.0
        %402 = vmatprep.subr.mxu0 0.0
        %403 = vmatpush1.msra.mxu0 0.0
        %404 = vmatprep.subr.mxu0 0.0
        %405 = vmatpush1.msra.mxu0 0.0
        %406 = vmatprep.subr.mxu0 0.0
        %407 = vmatpush1.msra.mxu0 0.0
        %408 = vmatprep.subr.mxu0 0.0
        %409 = vmatpush1.msra.mxu0 0.0
        %410 = vmatprep.subr.mxu0 0.0
        %411 = vmatpush1.msra.mxu0 0.0
        %412 = vmatprep.subr.mxu0 0.0
        %413 = vmatpush1.msra.mxu0 0.0
        %414 = vmatprep.subr.mxu0 0.0
        %415 = vmatpush1.msra.mxu0 0.0
        %416 = vmatprep.subr.mxu0 0.0
        %417 = vmatpush1.msra.mxu0 0.0
        %418 = vmatprep.subr.mxu0 0.0
        %419 = vmatpush1.msra.mxu0 0.0
        %420 = vmatprep.subr.mxu0 0.0
        %421 = vmatpush1.msra.mxu0 0.0
        %422 = vmatprep.subr.mxu0 0.0
        %423 = vmatpush1.msra.mxu0 %v134
        %424 = vmatprep.subr.mxu0 0.0
        %425 = vmatpush1.msra.mxu0 %v112
        %426 = vmatprep.subr.mxu0 0.0
        %427 = vmatpush2.msra.mxu0 0.0
        %428 = vmatprep.subr.mxu0 0.0
        %429 = vmatpush2.msra.mxu0 0.0
        %430 = vmatprep.subr.mxu0 0.0
        %431 = vmatpush2.msra.mxu0 0.0
        %432 = vmatprep.subr.mxu0 0.0
        %433 = vmatpush2.msra.mxu0 0.0
        %434 = vmatprep.subr.mxu0 0.0
        %435 = vmatpush2.msra.mxu0 0.0
        %436 = vmatprep.subr.mxu0 0.0
        %437 = vmatpush2.msra.mxu0 0.0
        %438 = vmatprep.subr.mxu0 0.0
        %439 = vmatpush2.msra.mxu0 0.0
        %440 = vmatprep.subr.mxu0 0.0
        %441 = vmatpush2.msra.mxu0 0.0
        %442 = vmatprep.subr.mxu0 0.0
        %443 = vmatpush2.msra.mxu0 0.0
        %444 = vmatprep.subr.mxu0 0.0
        %445 = vmatpush2.msra.mxu0 0.0
        %446 = vmatprep.subr.mxu0 0.0
        %447 = vmatpush2.msra.mxu0 0.0
        %448 = vmatprep.subr.mxu0 0.0
        %449 = vmatpush2.msra.mxu0 0.0
        %450 = vmatprep.subr.mxu0 0.0
        %451 = vmatpush2.msra.mxu0 0.0
        %452 = vmatprep.subr.mxu0 0.0
        %453 = vmatpush2.msra.mxu0 0.0
        %454 = vmatprep.subr.mxu0 0.0
        %455 = vmatpush2.msra.mxu0 0.0
        %456 = vmatprep.subr.mxu0 0.0
        %457 = vmatpush2.msra.mxu0 0.0
        %458 = vmatprep.mubr.f32.mxu0 0.0
        %459 = vmatmul.mubr.f32.gmra.mxu0 %v392
        %v460 = vpop.f32.mrf.mxu0
        %v461 = vadd.f32 0.0, %v460
        %v462 = vpop.f32.mrf.mxu0
        %463 = vdwg.mxu0
        %s464 = scalar_lea.vmem %s109, 24 [#allocation5]
        %465 = vst.msk [vmem:[%s464] sm:$0xff] %vm206, %v461
        %s466 = sand.u32 %s45, 1
        %s467 = scalar_lea.sflag [#allocation4], %s466
        %s468 = sand.u32 %s45, 1
        %s469 = smul.addr %s468, 32
        %s470 = scalar_lea.vmem [#allocation5], %s469
        // Predicated region
        $region29: #{tpu_custom_call.1} parent=23 // pred_check
          %p471 = pneg %p55
        $region30: #{tpu_custom_call.1} parent=23 // pred_check_branch
          %473 = sbr.rel (%p471) target = $region32
        $region31: #{tpu_custom_call.1} parent=23 // pred_region
          %s474 = smul.u32 4, %s16
          %s476 = ssub.s32 512, 512
          %477 = vsyncadd %s467, %s476
          %s478 = smul.addr %s474, 128
          %s479 = scalar_lea.hbm %s1, %s478
          %s480 = sshll.u32 %s470, 4
          %s481 = int_to_ptr.vmem [resolvable:$true] %s480
          %486 = dma.vmem_to_hbm [thread:$0]  %s481, 512, %s479, %s467, 128, 128, 8
        $region32: #{tpu_custom_call.1} parent=23 // pred_fallthru
          _
      $region24: #{tpu_custom_call.1} parent=5 // pred_fallthru
        _
      %p487 = scmp.le.s32.totalorder 2, %s11
      // Predicated region
      $region33: #{tpu_custom_call.1} parent=5 // pred_check
        %p488 = pneg %p487
      $region34: #{tpu_custom_call.1} parent=5 // pred_check_branch
        %490 = sbr.rel (%p488) target = $region36
      $region35: #{tpu_custom_call.1} parent=5 // pred_region
        %s491 = ssub.s32 %s11, 2
        // Predicated region
        $region37: #{tpu_custom_call.1} parent=35 // pred_check
          %p492 = pneg %p61
        $region38: #{tpu_custom_call.1} parent=35 // pred_check_branch
          %494 = sbr.rel (%p492) target = $region40
        $region39: #{tpu_custom_call.1} parent=35 // pred_region
          %s495 = sand.u32 %s46, 1
          %s496 = scalar_lea.sflag [#allocation4], %s495
          %s497 = sand.u32 %s46, 1
          %s498 = smul.addr %s497, 32
          %s499 = scalar_lea.vmem [#allocation5], %s498
          %500 = dma.done %s496, 512
        $region40: #{tpu_custom_call.1} parent=35 // pred_fallthru
          _
      $region36: #{tpu_custom_call.1} parent=5 // pred_fallthru
        _
    $region6: #{tpu_custom_call.1} parent=1 // loop_footer
      %s15 = sadd.s32 1, %s11
    $region7: #{tpu_custom_call.1} parent=1 // loop_footer_branch
      %10 = sbr.rel target = $region3
    $region8: #{tpu_custom_call.1} parent=1 // loop_exit
      _
    %501 = vsyncpa [#allocation3], 1
    %s502 = scalar_lea.sflag [#allocation3], 1
    %503 = vsyncpa %s502, 1
    %504 = vsyncpa [#allocation4], 1
    %s505 = scalar_lea.sflag [#allocation4], 1
    %506 = vsyncpa %s505, 1

</llo_original>
